<compile_context>
chip_gen: v7x
topology: tpu7x:2x2x1
jax: 0.10.0
libtpu: 0.0.40
codegen_flags: <defaults>
</compile_context>

<pallas_src>
import jax
import jax.numpy as jnp
import numpy as np
from jax.experimental import pallas as pl
from jax.experimental.pallas import tpu as pltpu

# ---- small, module-consistent config ---------------------------------------
NUM_EMOTIONS = 8   # num_emotions (module default)
HIDDEN = 32        # hidden_dim  (Config.hidden_dim, small synthetic value)
LATENT = 8         # latent_dim  (Config.latent_dim, small synthetic value)


# ---- gather kernel ----------------------------------------------------------
def emotion_gather_kernel(idx_ref, table_ref, o_ref):
    # idx_ref  : (B,)   int32   in SMEM  (scalar-indexed reads)
    # table_ref: (E, L) float32 in VMEM  (fused emb @ W + b table)
    # o_ref    : (B, L) float32 in VMEM
    B = o_ref.shape[0]
    # B is small and static -> fully unrolled at trace time; each iteration is
    # one scalar SMEM read + one dynamic-sublane VMEM row load + one row store.
    for i in range(B):
        row = idx_ref[i]
        o_ref[pl.ds(i, 1), :] = table_ref[pl.ds(row, 1), :]


# ---- wrappers ----------------------------------------------------------------
def fuse_params(emb, w, b):
    """Fold embedding table, projection weight and bias into one (E, L) table.

    embedding(x) @ W + b == (emb @ W + b)[x]   (dropout identity in eval).
    Weight-only math — compute once / let XLA fuse it; it never belongs in the
    per-call kernel at these sizes.
    """
    return emb @ w + b  # (E, L)


def emotion_encoder_forward(idx, emb, w, b):
    """idx: (B,) int emotion ids -> (B, LATENT) float32.

    emb: (E, H) embedding table; w: (H, L) proj weight (pre-transposed from
    torch's (L, H)); b: (L,) proj bias.
    """
    table = fuse_params(emb, w, b)                      # (E, L), ~256 B
    B = idx.shape[0]
    L = table.shape[1]
    idx_i32 = idx.astype(jnp.int32)                     # safe: E = 8

    return pl.pallas_call(
        emotion_gather_kernel,
        out_shape=jax.ShapeDtypeStruct((B, L), jnp.float32),
        in_specs=[
            pl.BlockSpec(memory_space=pltpu.MemorySpace.SMEM),  # indices
            pl.BlockSpec(memory_space=pltpu.MemorySpace.VMEM),  # fused table
        ],
        out_specs=pl.BlockSpec(memory_space=pltpu.MemorySpace.VMEM),
        # No grid / no dimension_semantics: single invocation (see header).
    )(idx_i32, table)


# ---- pure-JAX reference (same math, no Pallas) ------------------------------
def reference_forward(idx, emb, w, b):
    h = emb[idx]            # embedding lookup
    return h @ w + b        # proj (dropout = identity in eval)


# ---- demo --------------------------------------------------------------------
if __name__ == "__main__":
    key = jax.random.PRNGKey(0)
    k_emb, k_w, k_b, k_x = jax.random.split(key, 4)

    # deterministic params (proj weight stored pre-transposed as (H, L))
    emb = 0.1 * jax.random.normal(k_emb, (NUM_EMOTIONS, HIDDEN), jnp.float32)
    w = 0.1 * jax.random.normal(k_w, (HIDDEN, LATENT), jnp.float32)
    b = 0.1 * jax.random.normal(k_b, (LATENT,), jnp.float32)

    B = 4
    idx = jax.random.randint(k_x, (B,), 0, NUM_EMOTIONS, dtype=jnp.int32)

    out = emotion_encoder_forward(idx, emb, w, b)
    out = jax.block_until_ready(out)

    ref = reference_forward(idx, emb, w, b)
    assert out.shape == (B, LATENT)
    np.testing.assert_allclose(np.asarray(out), np.asarray(ref),
                               rtol=1e-5, atol=1e-6)

    print("KERNEL_OK")
</pallas_src>

<mosaic_0001>
module attributes {stable_mosaic.version = 11 : i64} {
  func.func @emotion_gather_kernel(%arg0: memref<4xi32, #tpu.memory_space<smem>>, %arg1: memref<8x8xf32, #tpu.memory_space<vmem>>, %arg2: memref<4x8xf32, #tpu.memory_space<vmem>>) attributes {dimension_semantics = [], scalar_prefetch = 0 : i64, scratch_operands = 0 : i64, tpu.core_type = #tpu.core_type<tc>} {
    %c0 = arith.constant 0 : index
    %0 = memref.load %arg0[%c0] : memref<4xi32, #tpu.memory_space<smem>>
    %1 = arith.index_cast %0 : i32 to index
    %c0_0 = arith.constant 0 : index
    %2 = vector.load %arg1[%1, %c0_0] : memref<8x8xf32, #tpu.memory_space<vmem>>, vector<1x8xf32>
    %c0_1 = arith.constant 0 : index
    %c0_2 = arith.constant 0 : index
    %3 = vector.load %arg2[%c0_1, %c0_2] : memref<4x8xf32, #tpu.memory_space<vmem>>, vector<1x8xf32>
    tpu.vector_store %arg2[%c0_1, %c0_2], %2 {strides = array<i32>} : memref<4x8xf32, #tpu.memory_space<vmem>>, vector<1x8xf32>,
    %c1 = arith.constant 1 : index
    %4 = memref.load %arg0[%c1] : memref<4xi32, #tpu.memory_space<smem>>
    %5 = arith.index_cast %4 : i32 to index
    %c0_3 = arith.constant 0 : index
    %6 = vector.load %arg1[%5, %c0_3] : memref<8x8xf32, #tpu.memory_space<vmem>>, vector<1x8xf32>
    %c1_4 = arith.constant 1 : index
    %c0_5 = arith.constant 0 : index
    %7 = vector.load %arg2[%c1_4, %c0_5] : memref<4x8xf32, #tpu.memory_space<vmem>>, vector<1x8xf32>
    tpu.vector_store %arg2[%c1_4, %c0_5], %6 {strides = array<i32>} : memref<4x8xf32, #tpu.memory_space<vmem>>, vector<1x8xf32>,
    %c2 = arith.constant 2 : index
    %8 = memref.load %arg0[%c2] : memref<4xi32, #tpu.memory_space<smem>>
    %9 = arith.index_cast %8 : i32 to index
    %c0_6 = arith.constant 0 : index
    %10 = vector.load %arg1[%9, %c0_6] : memref<8x8xf32, #tpu.memory_space<vmem>>, vector<1x8xf32>
    %c2_7 = arith.constant 2 : index
    %c0_8 = arith.constant 0 : index
    %11 = vector.load %arg2[%c2_7, %c0_8] : memref<4x8xf32, #tpu.memory_space<vmem>>, vector<1x8xf32>
    tpu.vector_store %arg2[%c2_7, %c0_8], %10 {strides = array<i32>} : memref<4x8xf32, #tpu.memory_space<vmem>>, vector<1x8xf32>,
    %c3 = arith.constant 3 : index
    %12 = memref.load %arg0[%c3] : memref<4xi32, #tpu.memory_space<smem>>
    %13 = arith.index_cast %12 : i32 to index
    %c0_9 = arith.constant 0 : index
    %14 = vector.load %arg1[%13, %c0_9] : memref<8x8xf32, #tpu.memory_space<vmem>>, vector<1x8xf32>
    %c3_10 = arith.constant 3 : index
    %c0_11 = arith.constant 0 : index
    %15 = vector.load %arg2[%c3_10, %c0_11] : memref<4x8xf32, #tpu.memory_space<vmem>>, vector<1x8xf32>
    tpu.vector_store %arg2[%c3_10, %c0_11], %14 {strides = array<i32>} : memref<4x8xf32, #tpu.memory_space<vmem>>, vector<1x8xf32>,
    return
  }
}

</mosaic_0001>

<llo_original>
// kernel: tpu_custom_call.1
$region0: #{tpu_custom_call.1}
  #allocation0 [shape = 'u32[]', space=smem, size = 0x4, offset = 0x4, fixed_abs, tag = 'smem constant byte address 0x4 - core index']
  #allocation1 [shape = 'u32[144,128]{1,0:T(1,128)}', space=vmem, size = 0x12000, scoped, tag = 'internal scratch']
  %s0 = inlined_call_operand.hbm [shape: s32[4], index: 0, kind: input, shape index: {}]
  %s1 = inlined_call_operand.hbm [shape: f32[8,8], index: 1, kind: input, shape index: {}]
  %s2 = inlined_call_operand.hbm [shape: f32[4,8], index: 2, kind: output, shape index: {}]
  %s3 = sld [smem:[#allocation0]]
  $region26: #{tpu_custom_call.1} parent=0
    _
  %s5 = ssub.s32 1, %s3
  %s6 = scalar_select 0, %s5, %s3
  $region1: #{tpu_custom_call.1} parent=0
    #allocation2 [shape = 'u8[512]{0}', space=smem, size = 0x200, scoped, tag = 'input window, operand 0, single buffered']
    #allocation3 [shape = 's32[1]{0}', space=sflag, size = 0x4, scoped, tag = 'scoped memory for tpu_custom_call.1']
    #allocation4 [shape = 's32[1]{0}', space=sflag, size = 0x4, scoped, tag = 'scoped memory for tpu_custom_call.1']
    #allocation5 [shape = 's32[1]{0}', space=sflag, size = 0x4, scoped, tag = 'scoped memory for tpu_custom_call.1']
    #allocation6 [shape = 'u8[4096]{0}', space=vmem, size = 0x1000, scoped, tag = 'input window, operand 1, single buffered']
    #allocation7 [shape = 'u8[2048]{0}', space=vmem, size = 0x800, scoped, tag = 'output window, operand 0, single buffered']
    %7 = vsyncpa [#allocation5], 0
    %8 = vsyncpa [#allocation3], 0
    %9 = vsyncpa [#allocation4], 0
    // Predicated region
    $region2: #{tpu_custom_call.1} parent=1 // pred_check
      _
    $region3: #{tpu_custom_call.1} parent=1 // pred_check_branch
      %11 = sbr.rel (0) target = $region5
    $region4: #{tpu_custom_call.1} parent=1 // pred_region
      %s13 = ssub.s32 16, 16
      %14 = vsyncadd [#allocation5], %s13
      %17 = dma.hbm_to_smem %s0, 16, [#allocation2], [#allocation5]
    $region5: #{tpu_custom_call.1} parent=1 // pred_fallthru
      _
    // Predicated region
    $region6: #{tpu_custom_call.1} parent=1 // pred_check
      _
    $region7: #{tpu_custom_call.1} parent=1 // pred_check_branch
      %19 = sbr.rel (0) target = $region9
    $region8: #{tpu_custom_call.1} parent=1 // pred_region
      %s21 = ssub.s32 128, 128
      %22 = vsyncadd [#allocation3], %s21
      %s24 = sshll.u32 [#allocation6], 4
      %s25 = int_to_ptr.vmem [resolvable:$true] %s24
      %27 = dma.hbm_to_vmem [thread:$0]  %s1, 128, %s25, [#allocation3]
    $region9: #{tpu_custom_call.1} parent=1 // pred_fallthru
      _
    // Predicated region
    $region10: #{tpu_custom_call.1} parent=1 // pred_check
      _
    $region11: #{tpu_custom_call.1} parent=1 // pred_check_branch
      %29 = sbr.rel (0) target = $region13
    $region12: #{tpu_custom_call.1} parent=1 // pred_region
      %30 = dma.done [#allocation5], 16
    $region13: #{tpu_custom_call.1} parent=1 // pred_fallthru
      _
    // Predicated region
    $region14: #{tpu_custom_call.1} parent=1 // pred_check
      _
    $region15: #{tpu_custom_call.1} parent=1 // pred_check_branch
      %32 = sbr.rel (0) target = $region17
    $region16: #{tpu_custom_call.1} parent=1 // pred_region
      %33 = dma.done [#allocation3], 128
    $region17: #{tpu_custom_call.1} parent=1 // pred_fallthru
      _
    %34 = sfence
    %s35 = sld [smem:[#allocation2]]
    %s36 = scalar_lea.vmem [#allocation6], %s35
    %v37 = vld [vmem:[%s36] sm:$0x1]
    %vm38 = vcmask 57344
    %39 = vst.msk [vmem:[#allocation7] sm:$0x1] %vm38, %v37
    %s40 = sld [smem:[#allocation2 + $0x1]]
    %s41 = scalar_lea.vmem [#allocation6], %s40
    %v42 = vld [vmem:[%s41] sm:$0x1]
    %43 = vst.msk [vmem:[#allocation7 + $0x1] sm:$0x1] %vm38, %v42
    %s44 = sld [smem:[#allocation2 + $0x2]]
    %s45 = scalar_lea.vmem [#allocation6], %s44
    %v46 = vld [vmem:[%s45] sm:$0x1]
    %47 = vst.msk [vmem:[#allocation7 + $0x2] sm:$0x1] %vm38, %v46
    %s48 = sld [smem:[#allocation2 + $0x3]]
    %s49 = scalar_lea.vmem [#allocation6], %s48
    %v50 = vld [vmem:[%s49] sm:$0x1]
    %51 = vst.msk [vmem:[#allocation7 + $0x3] sm:$0x1] %vm38, %v50
    // Predicated region
    $region18: #{tpu_custom_call.1} parent=1 // pred_check
      _
    $region19: #{tpu_custom_call.1} parent=1 // pred_check_branch
      %53 = sbr.rel (0) target = $region21
    $region20: #{tpu_custom_call.1} parent=1 // pred_region
      %s55 = ssub.s32 64, 64
      %56 = vsyncadd [#allocation4], %s55
      %s58 = sshll.u32 [#allocation7], 4
      %s59 = int_to_ptr.vmem [resolvable:$true] %s58
      %61 = dma.vmem_to_hbm [thread:$0]  %s59, 64, %s2, [#allocation4]
    $region21: #{tpu_custom_call.1} parent=1 // pred_fallthru
      _
    // Predicated region
    $region22: #{tpu_custom_call.1} parent=1 // pred_check
      _
    $region23: #{tpu_custom_call.1} parent=1 // pred_check_branch
      %63 = sbr.rel (0) target = $region25
    $region24: #{tpu_custom_call.1} parent=1 // pred_region
      %64 = dma.done [#allocation4], 64
    $region25: #{tpu_custom_call.1} parent=1 // pred_fallthru
      _
    %65 = vsyncpa [#allocation3], 1
    %66 = vsyncpa [#allocation4], 1
    %67 = vsyncpa [#allocation5], 1

</llo_original>
